<compile_context>
chip_gen: v5e
topology: v5e:2x2
jax: 0.10.0
libtpu: 0.0.40
codegen_flags: <defaults>
</compile_context>

<pallas_src>
import functools
import math

import jax
import jax.numpy as jnp
from jax import lax
from jax.experimental import pallas as pl
from jax.experimental.pallas import tpu as pltpu

_VMEM_LIMIT_BYTES = 48 * 1024 * 1024  # < v7x 64 MiB physical, > v5e 16 MiB default


# --------------------------------------------------------------------------- #
# Kernel 1: batched input projection  Gx[t] = x[t] @ W_i^T + (b_i + b_h)
# --------------------------------------------------------------------------- #
def _gx_kernel(x_ref,    # (TC, Bp, F)   time-major input chunk
               wi_ref,   # (F, 4Hp)      transposed, gate-padded input weights
               b_ref,    # (1, 4Hp)      pre-summed biases (b_i + b_h)
               gx_ref):  # (TC, Bp, 4Hp) gate pre-activations (f32)
    tc, bp, f = x_ref.shape
    hp4 = wi_ref.shape[1]
    xr = x_ref[...].reshape(tc * bp, f)                      # big M for the MXU
    g = jnp.dot(xr, wi_ref[...], preferred_element_type=jnp.float32) + b_ref[...]
    gx_ref[...] = g.reshape(tc, bp, hp4)


# --------------------------------------------------------------------------- #
# Kernel 2: serial recurrence + fused output projection
# --------------------------------------------------------------------------- #
def _recurrence_kernel(gx_ref,   # (TC, BC, 4Hp) precomputed gate pre-activations
                       wh_ref,   # (Hp, 4Hp)     transposed recurrent weights
                       wl_ref,   # (Hp, Op)      transposed output weights
                       bl_ref,   # (1, Op)
                       out_ref,  # (BC, Op)
                       h_scr,    # VMEM (BC, Hp) f32
                       c_scr,    # VMEM (BC, Hp) f32
                       *, hidden_pad, time_chunk, t_real, unroll):
    t_idx = pl.program_id(1)
    n_t = pl.num_programs(1)
    Hp = hidden_pad

    @pl.when(t_idx == 0)
    def _():
        h_scr[...] = jnp.zeros_like(h_scr)
        c_scr[...] = jnp.zeros_like(c_scr)

    wh = wh_ref[...]          # hoist resident weight load out of the loop
    cdt = wh.dtype
    needs_mask = (t_real % time_chunk) != 0

    def step(tt, carry):
        h, c = carry
        gx = gx_ref[tt]                                       # (BC, 4Hp) f32
        gates = gx + jnp.dot(h.astype(cdt), wh,
                             preferred_element_type=jnp.float32)
        i_t = jax.nn.sigmoid(gates[:, 0 * Hp:1 * Hp])         # lane-aligned slices
        f_t = jax.nn.sigmoid(gates[:, 1 * Hp:2 * Hp])
        g_t = jnp.tanh(gates[:, 2 * Hp:3 * Hp])
        o_t = jax.nn.sigmoid(gates[:, 3 * Hp:4 * Hp])
        c_new = f_t * c + i_t * g_t
        h_new = o_t * jnp.tanh(c_new)
        if needs_mask:  # only when T is not a multiple of the time chunk
            valid = (t_idx * time_chunk + tt) < t_real
            h_new = jnp.where(valid, h_new, h)
            c_new = jnp.where(valid, c_new, c)
        return h_new, c_new

    h_f, c_f = lax.fori_loop(0, time_chunk, step, (h_scr[...], c_scr[...]),
                             unroll=unroll)
    h_scr[...] = h_f
    c_scr[...] = c_f

    @pl.when(t_idx == n_t - 1)
    def _():
        out_ref[...] = (
            jnp.dot(h_f.astype(cdt), wl_ref[...],
                    preferred_element_type=jnp.float32)
            + bl_ref[...]
        ).astype(out_ref.dtype)


# --------------------------------------------------------------------------- #
# Wrapper
# --------------------------------------------------------------------------- #
def base_lstm_forward(x, W_i, b_i, W_h, b_h, W_lin, b_lin,
                      *, compute_dtype=jnp.float32):
    """x: (B, T, F) float32 — matches PyTorch forward's (batch, time, features)."""
    B, T, F = x.shape
    H = W_i.shape[0] // 4
    O = W_lin.shape[0]

    LANE, SUB = 128, 8
    Hp = pl.cdiv(H, LANE) * LANE          # per-gate lane-aligned hidden size
    Op = pl.cdiv(O, LANE) * LANE          # lane-dense output width
    Bp = pl.cdiv(B, SUB) * SUB            # sublane-aligned batch

    # Time chunk: target ~256 MXU rows for the input projection.
    tc = max(1, min(T, 256 // Bp)) if Bp < 256 else 1
    Tp = pl.cdiv(T, tc) * tc
    n_t = Tp // tc
    unroll = True if tc <= 8 else 4

    # Batch chunk (sharded across TensorCores via the "parallel" grid axis).
    bc = 128 if (Bp > 128 and Bp % 128 == 0) else Bp
    n_b = Bp // bc

    cdt = jnp.dtype(compute_dtype)

    # ---- parameter padding / layout (per-gate pad H -> Hp) ----
    def pad_gate_rows(w):                 # (4H, K) -> (4Hp, K)
        k = w.shape[1]
        w4 = jnp.pad(w.reshape(4, H, k), ((0, 0), (0, Hp - H), (0, 0)))
        return w4.reshape(4 * Hp, k)

    def pad_gate_vec(v):                  # (4H,) -> (4Hp,)
        return jnp.pad(v.reshape(4, H), ((0, 0), (0, Hp - H))).reshape(4 * Hp)

    wi_t = pad_gate_rows(W_i).T                                   # (F, 4Hp)
    wh_t = jnp.pad(pad_gate_rows(W_h), ((0, 0), (0, Hp - H))).T   # (Hp, 4Hp)
    b_g = (pad_gate_vec(b_i) + pad_gate_vec(b_h)).reshape(1, 4 * Hp)
    wl_t = jnp.pad(W_lin, ((0, Op - O), (0, Hp - H))).T           # (Hp, Op)
    bl_p = jnp.pad(b_lin, (0, Op - O)).reshape(1, Op)

    # time-major, batch/time padded input (pad + transpose fused by XLA)
    x_tm = jnp.transpose(x, (1, 0, 2))
    x_tm = jnp.pad(x_tm, ((0, Tp - T), (0, Bp - B), (0, 0)))      # (Tp, Bp, F)

    x_in = x_tm.astype(cdt)
    wi_in = wi_t.astype(cdt)
    wh_in = wh_t.astype(cdt)
    wl_in = wl_t.astype(cdt)

    cparams = pltpu.CompilerParams(dimension_semantics=("parallel",),
                                   vmem_limit_bytes=_VMEM_LIMIT_BYTES)

    # ---- kernel 1: gate pre-activations, streamed over time chunks ----
    gx = pl.pallas_call(
        _gx_kernel,
        out_shape=jax.ShapeDtypeStruct((Tp, Bp, 4 * Hp), jnp.float32),
        grid=(n_t,),
        in_specs=[
            pl.BlockSpec((tc, Bp, F), lambda i: (i, 0, 0)),
            pl.BlockSpec((F, 4 * Hp), lambda i: (0, 0)),
            pl.BlockSpec((1, 4 * Hp), lambda i: (0, 0)),
        ],
        out_specs=pl.BlockSpec((tc, Bp, 4 * Hp), lambda i: (i, 0, 0)),
        compiler_params=cparams,
    )(x_in, wi_in, b_g)

    # ---- kernel 2: recurrence + fused output projection ----
    kernel2 = functools.partial(_recurrence_kernel, hidden_pad=Hp,
                                time_chunk=tc, t_real=T, unroll=unroll)
    out_p = pl.pallas_call(
        kernel2,
        out_shape=jax.ShapeDtypeStruct((Bp, Op), jnp.float32),
        grid=(n_b, n_t),
        in_specs=[
            pl.BlockSpec((tc, bc, 4 * Hp), lambda b, t: (t, b, 0)),
            pl.BlockSpec((Hp, 4 * Hp), lambda b, t: (0, 0)),
            pl.BlockSpec((Hp, Op), lambda b, t: (0, 0)),
            pl.BlockSpec((1, Op), lambda b, t: (0, 0)),
        ],
        out_specs=pl.BlockSpec((bc, Op), lambda b, t: (b, 0)),
        scratch_shapes=[
            pltpu.VMEM((bc, Hp), jnp.float32),
            pltpu.VMEM((bc, Hp), jnp.float32),
        ],
        compiler_params=pltpu.CompilerParams(
            dimension_semantics=("parallel", "arbitrary"),
            vmem_limit_bytes=_VMEM_LIMIT_BYTES),
    )(gx, wh_in, wl_in, bl_p)

    return out_p[:B, :O]


# --------------------------------------------------------------------------- #
# Pure-JAX reference (mirrors the PyTorch forward)
# --------------------------------------------------------------------------- #
def _jax_reference(x, W_i, b_i, W_h, b_h, W_lin, b_lin):
    B, T, F = x.shape
    H = W_h.shape[1]
    h = jnp.zeros((B, H), jnp.float32)
    c = jnp.zeros((B, H), jnp.float32)
    for t in range(T):
        x_t = x[:, t, :]
        gates = x_t @ W_i.T + b_i + h @ W_h.T + b_h
        i_t = jax.nn.sigmoid(gates[:, :H])
        f_t = jax.nn.sigmoid(gates[:, H:2 * H])
        g_t = jnp.tanh(gates[:, 2 * H:3 * H])
        o_t = jax.nn.sigmoid(gates[:, 3 * H:])
        c = f_t * c + i_t * g_t
        h = o_t * jnp.tanh(c)
    return h @ W_lin.T + b_lin


if __name__ == "__main__":
    # Small shapes consistent with the module's forward: (batch, time, features)
    B, T, F = 2, 8, 4
    H, O = 32, 4

    key = jax.random.PRNGKey(0)
    ks = jax.random.split(key, 7)
    stdv = 1.0 / math.sqrt(H)

    def u(k, shape):
        return jax.random.uniform(k, shape, jnp.float32, -stdv, stdv)

    # Parameter shapes mirror BaseLSTM.__init__ (single layer used in forward).
    W_i = u(ks[0], (4 * H, F))
    b_i = u(ks[1], (4 * H,))
    W_h = u(ks[2], (4 * H, H))
    b_h = u(ks[3], (4 * H,))
    W_lin = u(ks[4], (O, H))
    b_lin = u(ks[5], (O,))

    x = jax.random.normal(ks[6], (B, T, F), jnp.float32)

    # TODO(synk): multi-layer (n_layer > 1) stacks are parameters-only in the
    # reference forward (never used); only the single-layer path is implemented.
    out = base_lstm_forward(x, W_i, b_i, W_h, b_h, W_lin, b_lin)
    out = jax.block_until_ready(out)

    ref = _jax_reference(x, W_i, b_i, W_h, b_h, W_lin, b_lin)
    assert out.shape == (B, O)
    assert jnp.allclose(out, ref, atol=1e-4, rtol=1e-4)

    print("KERNEL_OK")
</pallas_src>

<mosaic_0001>
module attributes {stable_mosaic.version = 11 : i64} {
  func.func @_gx_kernel(%arg0: i32, %arg1: memref<8x8x4xf32, #tpu.memory_space<vmem>>, %arg2: memref<4x512xf32, #tpu.memory_space<vmem>>, %arg3: memref<1x512xf32, #tpu.memory_space<vmem>>, %arg4: memref<8x8x512xf32, #tpu.memory_space<vmem>>) attributes {dimension_semantics = [#tpu.dimension_semantics<parallel>], iteration_bounds = array<i64: 1>, scalar_prefetch = 0 : i64, scratch_operands = 0 : i64, tpu.core_type = #tpu.core_type<tc>, window_params = [{transform_indices = @transform_0, window_bounds = array<i64: 8, 8, 4>}, {pipeline_mode = #tpu.pipeline_mode<synchronous>, transform_indices = @transform_1, window_bounds = array<i64: 4, 512>}, {pipeline_mode = #tpu.pipeline_mode<synchronous>, transform_indices = @transform_2, window_bounds = array<i64: 1, 512>}, {transform_indices = @transform_3, window_bounds = array<i64: 8, 8, 512>}]} {
    %c0 = arith.constant 0 : index
    %c0_0 = arith.constant 0 : index
    %c0_1 = arith.constant 0 : index
    %0 = vector.load %arg1[%c0, %c0_0, %c0_1] : memref<8x8x4xf32, #tpu.memory_space<vmem>>, vector<8x8x4xf32>
    %1 = vector.shape_cast %0 : vector<8x8x4xf32> to vector<64x4xf32>
    %c0_2 = arith.constant 0 : index
    %c0_3 = arith.constant 0 : index
    %2 = vector.load %arg2[%c0_2, %c0_3] : memref<4x512xf32, #tpu.memory_space<vmem>>, vector<4x512xf32>
    %cst = arith.constant dense<0.000000e+00> : vector<64x512xf32>
    %3 = tpu.matmul %1, %2, %cst {dimension_numbers = #tpu.dot_dimension_numbers<[1], [0], [0], [1], [0, 0, 1, 1], [], []>} : vector<64x4xf32>, vector<4x512xf32>, vector<64x512xf32> -> vector<64x512xf32>
    %c0_4 = arith.constant 0 : index
    %c0_5 = arith.constant 0 : index
    %4 = vector.load %arg3[%c0_4, %c0_5] : memref<1x512xf32, #tpu.memory_space<vmem>>, vector<1x512xf32>
    %5 = vector.broadcast %4 : vector<1x512xf32> to vector<64x512xf32>
    %6 = arith.addf %3, %5 : vector<64x512xf32>
    %7 = vector.shape_cast %6 : vector<64x512xf32> to vector<8x8x512xf32>
    %c0_6 = arith.constant 0 : index
    %c0_7 = arith.constant 0 : index
    %c0_8 = arith.constant 0 : index
    %8 = vector.load %arg4[%c0_6, %c0_7, %c0_8] : memref<8x8x512xf32, #tpu.memory_space<vmem>>, vector<8x8x512xf32>
    tpu.vector_store %arg4[%c0_6, %c0_7, %c0_8], %7 {strides = array<i32>} : memref<8x8x512xf32, #tpu.memory_space<vmem>>, vector<8x8x512xf32>,
    return
  }
  func.func @transform_0(%arg0: i32) -> (i32, i32, i32) {
    %c0_i32 = arith.constant 0 : i32
    %c0_i32_0 = arith.constant 0 : i32
    %c0_i32_1 = arith.constant 0 : i32
    return %arg0, %c0_i32, %c0_i32_0 : i32, i32, i32
  }
  func.func @transform_1(%arg0: i32) -> (i32, i32) {
    %c0_i32 = arith.constant 0 : i32
    %c0_i32_0 = arith.constant 0 : i32
    %c0_i32_1 = arith.constant 0 : i32
    return %c0_i32, %c0_i32_0 : i32, i32
  }
  func.func @transform_2(%arg0: i32) -> (i32, i32) {
    %c0_i32 = arith.constant 0 : i32
    %c0_i32_0 = arith.constant 0 : i32
    %c0_i32_1 = arith.constant 0 : i32
    return %c0_i32, %c0_i32_0 : i32, i32
  }
  func.func @transform_3(%arg0: i32) -> (i32, i32, i32) {
    %c0_i32 = arith.constant 0 : i32
    %c0_i32_0 = arith.constant 0 : i32
    %c0_i32_1 = arith.constant 0 : i32
    return %arg0, %c0_i32, %c0_i32_0 : i32, i32, i32
  }
}

</mosaic_0001>

<llo_original>
// kernel: tpu_custom_call.1
$region0: #{tpu_custom_call.1}
  #allocation0 [shape = 'u32[]', space=smem, size = 0x4, offset = 0x4, fixed_abs, tag = 'smem constant byte address 0x4 - core index']
  #allocation1 [shape = 'u32[72,128]{1,0:T(1,128)}', space=vmem, size = 0x9000, scoped, tag = 'internal scratch']
  %s0 = inlined_call_operand.vmem [shape: f32[8,8,4], index: 0, kind: input, shape index: {}]
  %s1 = inlined_call_operand.vmem [shape: f32[4,512], index: 1, kind: input, shape index: {}]
  %s2 = inlined_call_operand.vmem [shape: f32[1,512], index: 2, kind: input, shape index: {}]
  %s3 = inlined_call_operand.hbm [shape: f32[8,8,512], index: 3, kind: output, shape index: {}]
  %s4 = sld [smem:[#allocation0]]
  $region22: #{tpu_custom_call.1} parent=0
    _
  %s6 = ssub.s32 1, %s4
  %s7 = scalar_select 0, %s6, %s4
  $region1: #{tpu_custom_call.1} parent=0
    #allocation2 [shape = 'u8[131072]{0}', space=vmem, size = 0x20000, scoped, tag = 'output window, operand 0, single buffered']
    #allocation3 [shape = 's32[1]{0}', space=sflag, size = 0x4, scoped, tag = 'scoped memory for tpu_custom_call.1']
    %8 = vsyncpa [#allocation3], 0
    // Predicated region
    $region2: #{tpu_custom_call.1} parent=1 // pred_check
      _
    $region3: #{tpu_custom_call.1} parent=1 // pred_check_branch
      %10 = sbr.rel (0) target = $region5
    $region4: #{tpu_custom_call.1} parent=1 // pred_region
      _
    $region5: #{tpu_custom_call.1} parent=1 // pred_fallthru
      _
    // Predicated region
    $region6: #{tpu_custom_call.1} parent=1 // pred_check
      _
    $region7: #{tpu_custom_call.1} parent=1 // pred_check_branch
      %12 = sbr.rel (0) target = $region9
    $region8: #{tpu_custom_call.1} parent=1 // pred_region
      _
    $region9: #{tpu_custom_call.1} parent=1 // pred_fallthru
      _
    // Predicated region
    $region10: #{tpu_custom_call.1} parent=1 // pred_check
      _
    $region11: #{tpu_custom_call.1} parent=1 // pred_check_branch
      %14 = sbr.rel (0) target = $region13
    $region12: #{tpu_custom_call.1} parent=1 // pred_region
      _
    $region13: #{tpu_custom_call.1} parent=1 // pred_fallthru
      _
    %v15 = vld [vmem:[%s0] sm:$0xff]
    %v16 = vld [vmem:[%s0 + $0x8] sm:$0xff]
    %v17 = vld [vmem:[%s0 + $0x10] sm:$0xff]
    %v18 = vld [vmem:[%s0 + $0x18] sm:$0xff]
    %v19 = vld [vmem:[%s0 + $0x20] sm:$0xff]
    %v20 = vld [vmem:[%s0 + $0x28] sm:$0xff]
    %v21 = vld [vmem:[%s0 + $0x30] sm:$0xff]
    %v22 = vld [vmem:[%s0 + $0x38] sm:$0xff]
    %v23 = vld [vmem:[%s1] sm:$0xff]
    %v24 = vld [vmem:[%s1 + $0x8] sm:$0xff]
    %v25 = vld [vmem:[%s2] sm:$0xf]
    %v27 = vperm.slane %v25, 0
    %v28 = vperm.slane %v25, 1
    %v29 = vperm.slane %v25, 2
    %v30 = vperm.slane %v25, 3
    %37 = vst [vmem:[#allocation1] ss:$2 sm:$0xff] %v23
    %s38 = scalar_lea.vmem [#allocation1], 16
    %39 = vst [vmem:[%s38] ss:$2 sm:$0xff] %v24
    %v40 = vld.sshfl [vmem:[#allocation1] sm:$0xff pattern:$0x75316420]
    %v41 = vld.sshfl [vmem:[#allocation1 + $0x8] sm:$0xff pattern:$0x75316420]
    %v42 = vld.sshfl [vmem:[#allocation1 + $0x10] sm:$0xff pattern:$0x75316420]
    %v43 = vld.sshfl [vmem:[#allocation1 + $0x18] sm:$0xff pattern:$0x75316420]
    %vm44 = vcmask 31744
    %v46 = vsel %vm44, %v15, 0
    %v49 = vsel %vm44, %v16, 0
    %v52 = vsel %vm44, %v17, 0
    %v55 = vsel %vm44, %v18, 0
    %v58 = vsel %vm44, %v19, 0
    %v61 = vsel %vm44, %v20, 0
    %v64 = vsel %vm44, %v21, 0
    %v67 = vsel %vm44, %v22, 0
    %vm69 = vcmask 1043456
    %v70 = vsel %vm69, %v40, 0
    %v72 = vsel %vm69, %v41, 0
    %v74 = vsel %vm69, %v42, 0
    %v76 = vsel %vm69, %v43, 0
    %78 = vmatpush.msra.mxu0 0.0
    %79 = vmatpush.msra.mxu0 0.0
    %80 = vmatpush.msra.mxu0 0.0
    %81 = vmatpush.msra.mxu0 0.0
    %82 = vmatpush.msra.mxu0 0.0
    %83 = vmatpush.msra.mxu0 0.0
    %84 = vmatpush.msra.mxu0 0.0
    %85 = vmatpush.msra.mxu0 0.0
    %86 = vmatpush.msra.mxu0 0.0
    %87 = vmatpush.msra.mxu0 0.0
    %88 = vmatpush.msra.mxu0 0.0
    %89 = vmatpush.msra.mxu0 0.0
    %90 = vmatpush.msra.mxu0 0.0
    %91 = vmatpush.msra.mxu0 0.0
    %92 = vmatpush.msra.mxu0 0.0
    %93 = vmatpush.msra.mxu0 %v70
    %94 = vmatmul.f32.gmra.mxu0 %v46
    %v95 = vpop.f32.mrf.mxu0
    %v96 = vadd.f32 %v27, %v95
    %97 = vmatmul.f32.gmra.mxu0 %v49
    %v98 = vpop.f32.mrf.mxu0
    %v99 = vadd.f32 %v27, %v98
    %100 = vmatmul.f32.gmra.mxu0 %v52
    %v101 = vpop.f32.mrf.mxu0
    %v102 = vadd.f32 %v27, %v101
    %103 = vmatmul.f32.gmra.mxu0 %v55
    %v104 = vpop.f32.mrf.mxu0
    %v105 = vadd.f32 %v27, %v104
    %106 = vmatmul.f32.gmra.mxu0 %v58
    %v107 = vpop.f32.mrf.mxu0
    %v108 = vadd.f32 %v27, %v107
    %109 = vmatmul.f32.gmra.mxu0 %v61
    %v110 = vpop.f32.mrf.mxu0
    %v111 = vadd.f32 %v27, %v110
    %112 = vmatmul.f32.gmra.mxu0 %v64
    %v113 = vpop.f32.mrf.mxu0
    %v114 = vadd.f32 %v27, %v113
    %115 = vmatmul.f32.gmra.mxu0 %v67
    %v116 = vpop.f32.mrf.mxu0
    %v117 = vadd.f32 %v27, %v116
    %118 = vdwg.mxu0
    %119 = vmatpush.msra.mxu0 0.0
    %120 = vmatpush.msra.mxu0 0.0
    %121 = vmatpush.msra.mxu0 0.0
    %122 = vmatpush.msra.mxu0 0.0
    %123 = vmatpush.msra.mxu0 0.0
    %124 = vmatpush.msra.mxu0 0.0
    %125 = vmatpush.msra.mxu0 0.0
    %126 = vmatpush.msra.mxu0 0.0
    %127 = vmatpush.msra.mxu0 0.0
    %128 = vmatpush.msra.mxu0 0.0
    %129 = vmatpush.msra.mxu0 0.0
    %130 = vmatpush.msra.mxu0 0.0
    %131 = vmatpush.msra.mxu0 0.0
    %132 = vmatpush.msra.mxu0 0.0
    %133 = vmatpush.msra.mxu0 0.0
    %134 = vmatpush.msra.mxu0 %v72
    %135 = vmatmul.f32.gmra.mxu0 %v46
    %v136 = vpop.f32.mrf.mxu0
    %v137 = vadd.f32 %v28, %v136
    %138 = vmatmul.f32.gmra.mxu0 %v49
    %v139 = vpop.f32.mrf.mxu0
    %v140 = vadd.f32 %v28, %v139
    %141 = vmatmul.f32.gmra.mxu0 %v52
    %v142 = vpop.f32.mrf.mxu0
    %v143 = vadd.f32 %v28, %v142
    %144 = vmatmul.f32.gmra.mxu0 %v55
    %v145 = vpop.f32.mrf.mxu0
    %v146 = vadd.f32 %v28, %v145
    %147 = vmatmul.f32.gmra.mxu0 %v58
    %v148 = vpop.f32.mrf.mxu0
    %v149 = vadd.f32 %v28, %v148
    %150 = vmatmul.f32.gmra.mxu0 %v61
    %v151 = vpop.f32.mrf.mxu0
    %v152 = vadd.f32 %v28, %v151
    %153 = vmatmul.f32.gmra.mxu0 %v64
    %v154 = vpop.f32.mrf.mxu0
    %v155 = vadd.f32 %v28, %v154
    %156 = vmatmul.f32.gmra.mxu0 %v67
    %v157 = vpop.f32.mrf.mxu0
    %v158 = vadd.f32 %v28, %v157
    %159 = vdwg.mxu0
    %160 = vmatpush.msra.mxu0 0.0
    %161 = vmatpush.msra.mxu0 0.0
    %162 = vmatpush.msra.mxu0 0.0
    %163 = vmatpush.msra.mxu0 0.0
    %164 = vmatpush.msra.mxu0 0.0
    %165 = vmatpush.msra.mxu0 0.0
    %166 = vmatpush.msra.mxu0 0.0
    %167 = vmatpush.msra.mxu0 0.0
    %168 = vmatpush.msra.mxu0 0.0
    %169 = vmatpush.msra.mxu0 0.0
    %170 = vmatpush.msra.mxu0 0.0
    %171 = vmatpush.msra.mxu0 0.0
    %172 = vmatpush.msra.mxu0 0.0
    %173 = vmatpush.msra.mxu0 0.0
    %174 = vmatpush.msra.mxu0 0.0
    %175 = vmatpush.msra.mxu0 %v74
    %176 = vmatmul.f32.gmra.mxu0 %v46
    %v177 = vpop.f32.mrf.mxu0
    %v178 = vadd.f32 %v29, %v177
    %179 = vmatmul.f32.gmra.mxu0 %v49
    %v180 = vpop.f32.mrf.mxu0
    %v181 = vadd.f32 %v29, %v180
    %182 = vmatmul.f32.gmra.mxu0 %v52
    %v183 = vpop.f32.mrf.mxu0
    %v184 = vadd.f32 %v29, %v183
    %185 = vmatmul.f32.gmra.mxu0 %v55
    %v186 = vpop.f32.mrf.mxu0
    %v187 = vadd.f32 %v29, %v186
    %188 = vmatmul.f32.gmra.mxu0 %v58
    %v189 = vpop.f32.mrf.mxu0
    %v190 = vadd.f32 %v29, %v189
    %191 = vmatmul.f32.gmra.mxu0 %v61
    %v192 = vpop.f32.mrf.mxu0
    %v193 = vadd.f32 %v29, %v192
    %194 = vmatmul.f32.gmra.mxu0 %v64
    %v195 = vpop.f32.mrf.mxu0
    %v196 = vadd.f32 %v29, %v195
    %197 = vmatmul.f32.gmra.mxu0 %v67
    %v198 = vpop.f32.mrf.mxu0
    %v199 = vadd.f32 %v29, %v198
    %200 = vdwg.mxu0
    %201 = vmatpush.msra.mxu0 0.0
    %202 = vmatpush.msra.mxu0 0.0
    %203 = vmatpush.msra.mxu0 0.0
    %204 = vmatpush.msra.mxu0 0.0
    %205 = vmatpush.msra.mxu0 0.0
    %206 = vmatpush.msra.mxu0 0.0
    %207 = vmatpush.msra.mxu0 0.0
    %208 = vmatpush.msra.mxu0 0.0
    %209 = vmatpush.msra.mxu0 0.0
    %210 = vmatpush.msra.mxu0 0.0
    %211 = vmatpush.msra.mxu0 0.0
    %212 = vmatpush.msra.mxu0 0.0
    %213 = vmatpush.msra.mxu0 0.0
    %214 = vmatpush.msra.mxu0 0.0
    %215 = vmatpush.msra.mxu0 0.0
    %216 = vmatpush.msra.mxu0 %v76
    %217 = vmatmul.f32.gmra.mxu0 %v46
    %v218 = vpop.f32.mrf.mxu0
    %v219 = vadd.f32 %v30, %v218
    %220 = vmatmul.f32.gmra.mxu0 %v49
    %v221 = vpop.f32.mrf.mxu0
    %v222 = vadd.f32 %v30, %v221
    %223 = vmatmul.f32.gmra.mxu0 %v52
    %v224 = vpop.f32.mrf.mxu0
    %v225 = vadd.f32 %v30, %v224
    %226 = vmatmul.f32.gmra.mxu0 %v55
    %v227 = vpop.f32.mrf.mxu0
    %v228 = vadd.f32 %v30, %v227
    %229 = vmatmul.f32.gmra.mxu0 %v58
    %v230 = vpop.f32.mrf.mxu0
    %v231 = vadd.f32 %v30, %v230
    %232 = vmatmul.f32.gmra.mxu0 %v61
    %v233 = vpop.f32.mrf.mxu0
    %v234 = vadd.f32 %v30, %v233
    %235 = vmatmul.f32.gmra.mxu0 %v64
    %v236 = vpop.f32.mrf.mxu0
    %v237 = vadd.f32 %v30, %v236
    %238 = vmatmul.f32.gmra.mxu0 %v67
    %v239 = vpop.f32.mrf.mxu0
    %v240 = vadd.f32 %v30, %v239
    %241 = vdwg.mxu0
    %242 = vst [vmem:[#allocation2] sm:$0xff] %v96
    %243 = vst [vmem:[#allocation2 + $0x8] sm:$0xff] %v137
    %244 = vst [vmem:[#allocation2 + $0x10] sm:$0xff] %v178
    %245 = vst [vmem:[#allocation2 + $0x18] sm:$0xff] %v219
    %246 = vst [vmem:[#allocation2 + $0x20] sm:$0xff] %v99
    %247 = vst [vmem:[#allocation2 + $0x28] sm:$0xff] %v140
    %248 = vst [vmem:[#allocation2 + $0x30] sm:$0xff] %v181
    %249 = vst [vmem:[#allocation2 + $0x38] sm:$0xff] %v222
    %250 = vst [vmem:[#allocation2 + $0x40] sm:$0xff] %v102
    %251 = vst [vmem:[#allocation2 + $0x48] sm:$0xff] %v143
    %252 = vst [vmem:[#allocation2 + $0x50] sm:$0xff] %v184
    %253 = vst [vmem:[#allocation2 + $0x58] sm:$0xff] %v225
    %254 = vst [vmem:[#allocation2 + $0x60] sm:$0xff] %v105
    %255 = vst [vmem:[#allocation2 + $0x68] sm:$0xff] %v146
    %256 = vst [vmem:[#allocation2 + $0x70] sm:$0xff] %v187
    %257 = vst [vmem:[#allocation2 + $0x78] sm:$0xff] %v228
    %258 = vst [vmem:[#allocation2 + $0x80] sm:$0xff] %v108
    %259 = vst [vmem:[#allocation2 + $0x88] sm:$0xff] %v149
    %260 = vst [vmem:[#allocation2 + $0x90] sm:$0xff] %v190
    %261 = vst [vmem:[#allocation2 + $0x98] sm:$0xff] %v231
    %262 = vst [vmem:[#allocation2 + $0xa0] sm:$0xff] %v111
    %263 = vst [vmem:[#allocation2 + $0xa8] sm:$0xff] %v152
    %264 = vst [vmem:[#allocation2 + $0xb0] sm:$0xff] %v193
    %265 = vst [vmem:[#allocation2 + $0xb8] sm:$0xff] %v234
    %266 = vst [vmem:[#allocation2 + $0xc0] sm:$0xff] %v114
    %267 = vst [vmem:[#allocation2 + $0xc8] sm:$0xff] %v155
    %268 = vst [vmem:[#allocation2 + $0xd0] sm:$0xff] %v196
    %269 = vst [vmem:[#allocation2 + $0xd8] sm:$0xff] %v237
    %270 = vst [vmem:[#allocation2 + $0xe0] sm:$0xff] %v117
    %271 = vst [vmem:[#allocation2 + $0xe8] sm:$0xff] %v158
    %272 = vst [vmem:[#allocation2 + $0xf0] sm:$0xff] %v199
    %273 = vst [vmem:[#allocation2 + $0xf8] sm:$0xff] %v240
    // Predicated region
    $region14: #{tpu_custom_call.1} parent=1 // pred_check
      _
    $region15: #{tpu_custom_call.1} parent=1 // pred_check_branch
      %275 = sbr.rel (0) target = $region17
    $region16: #{tpu_custom_call.1} parent=1 // pred_region
      %277 = vsyncadd [#allocation3], 0
      %s278 = sshll.u32 [#allocation2], 4
      %s279 = int_to_ptr.vmem [resolvable:$true] %s278
      %s280 = sshll.u32 %s3, 4
      %s281 = int_to_ptr.hbm [resolvable:$true] %s280
      %286 = dma.vmem_to_hbm [thread:$0]  %s279, 4096, %s281, [#allocation3], 512, 512, 32
    $region17: #{tpu_custom_call.1} parent=1 // pred_fallthru
      _
    // Predicated region
    $region18: #{tpu_custom_call.1} parent=1 // pred_check
      _
    $region19: #{tpu_custom_call.1} parent=1 // pred_check_branch
      %288 = sbr.rel (0) target = $region21
    $region20: #{tpu_custom_call.1} parent=1 // pred_region
      %290 = dma.done [#allocation3], 4096
    $region21: #{tpu_custom_call.1} parent=1 // pred_fallthru
      _
    %291 = vsyncpa [#allocation3], 1

</llo_original>
